<compile_context>
chip_gen: v7x
topology: tpu7x:2x2x1
jax: 0.10.0
libtpu: 0.0.40
codegen_flags: <defaults>
</compile_context>

<pallas_src>
import jax
import jax.numpy as jnp
from jax.experimental import pallas as pl
from jax.experimental.pallas import tpu as pltpu


def _round_up(x: int, m: int) -> int:
    return ((x + m - 1) // m) * m


# ----------------------------------------------------------------------------
# Kernel 1: truncate-along-seq + flatten for ONE layer.
#   x: (B, S2, D) -> (B*s1, D)  ==  x[:, :s1].reshape(-1, D)
# Implemented as a lane-dense 2-D prefix-column copy on x.reshape(B, S2*D).
# ----------------------------------------------------------------------------
def _copy_block_kernel(x_ref, o_ref):
    o_ref[...] = x_ref[...]


def truncate_flatten(x, s1, *, target_block_bytes=8 * 1024 * 1024,
                     col_tile_cap=8192):
    B, S2, D = x.shape
    assert s1 <= S2
    if s1 == S2:
        # No truncation: contiguous row-major reshape is free — skip the kernel.
        return x.reshape(B * s1, D)

    rows = B
    total_cols = S2 * D
    cols_out = s1 * D
    x2d = x.reshape(rows, total_cols)           # free (contiguous) reshape
    itemsize = x.dtype.itemsize

    # Lane-dense column tile (multiple of 128); the last column block may be
    # partial (masked vst on that one tile only) — output is exact width.
    tc = min(_round_up(cols_out, 128), col_tile_cap)
    # Row tile: as large as possible at ~target_block_bytes per block so
    # (2 in + 2 out) double-buffers stay inside the vmem limit.  No 1024 cap.
    tb_limit = max(8, (target_block_bytes // max(tc * itemsize, 1)) // 8 * 8)
    tb = rows if rows <= tb_limit else tb_limit

    # v7x megacore: if everything fits one block, split once so both
    # TensorCores get work (no effect on single-TC v5e/v6e).
    if pl.cdiv(rows, tb) * pl.cdiv(cols_out, tc) == 1:
        if rows >= 16:
            tb = _round_up(pl.cdiv(rows, 2), 8)
        elif cols_out >= 256:
            tc = _round_up(pl.cdiv(cols_out, 2), 128)

    grid = (pl.cdiv(rows, tb), pl.cdiv(cols_out, tc))

    out2d = pl.pallas_call(
        _copy_block_kernel,
        out_shape=jax.ShapeDtypeStruct((rows, cols_out), x.dtype),
        grid=grid,
        in_specs=[pl.BlockSpec((tb, tc), lambda i, j: (i, j))],
        out_specs=pl.BlockSpec((tb, tc), lambda i, j: (i, j)),
        compiler_params=pltpu.CompilerParams(
            dimension_semantics=("parallel", "parallel"),
            vmem_limit_bytes=48 * 1024 * 1024),
    )(x2d)
    return out2d.reshape(B * s1, D)             # free (contiguous) reshape


# ----------------------------------------------------------------------------
# Kernel 2: row-wise Pearson correlation, streamed over N (shifted moments).
# ----------------------------------------------------------------------------
def _make_pearson_kernel(n: int, tn: int, grid_n: int):
    last = grid_n - 1
    rem = n - last * tn                 # valid columns in the last N tile
    k = tn // 128                       # 128-wide lane-aligned sub-slices
    inv_n = 1.0 / float(n)

    def kernel(t_ref, p_ref, o_ref, mu_t, mu_p, st, sp, stp, stt, spp):
        j = pl.program_id(1)            # reduction axis (last)

        @pl.when(j == 0)
        def _init():
            # Shift estimate = row-mean of (valid part of) the first tile.
            t0 = t_ref[...].astype(jnp.float32)
            p0 = p_ref[...].astype(jnp.float32)
            v = tn if grid_n > 1 else rem
            if v < tn:
                col = jax.lax.broadcasted_iota(jnp.int32, t0.shape, 1)
                msk = col < v
                t0 = jnp.where(msk, t0, 0.0)
                p0 = jnp.where(msk, p0, 0.0)
            inv_v = 1.0 / float(v)
            mt = jnp.sum(t0, axis=-1, keepdims=True) * inv_v
            mp = jnp.sum(p0, axis=-1, keepdims=True) * inv_v
            mu_t[...] = jnp.broadcast_to(mt, mu_t.shape)
            mu_p[...] = jnp.broadcast_to(mp, mu_p.shape)
            st[...] = jnp.zeros_like(st)
            sp[...] = jnp.zeros_like(sp)
            stp[...] = jnp.zeros_like(stp)
            stt[...] = jnp.zeros_like(stt)
            spp[...] = jnp.zeros_like(spp)

        def _accum(valid_cols):
            # Tree-add the 128-wide sub-slices into narrow (tm,128) partials;
            # only the (at most one) partially-valid slice is masked, and only
            # in the tail tile (valid_cols is static).
            mt = mu_t[...]
            mp = mu_p[...]
            at = ap = atp = att = app = None
            for s in range(k):
                lo = s * 128
                if lo >= valid_cols:
                    break
                ts = t_ref[:, lo:lo + 128].astype(jnp.float32) - mt
                ps = p_ref[:, lo:lo + 128].astype(jnp.float32) - mp
                nvalid = valid_cols - lo
                if nvalid < 128:
                    lane = jax.lax.broadcasted_iota(jnp.int32, ts.shape, 1)
                    msk = lane < nvalid
                    ts = jnp.where(msk, ts, 0.0)
                    ps = jnp.where(msk, ps, 0.0)
                if at is None:
                    at, ap = ts, ps
                    atp, att, app = ts * ps, ts * ts, ps * ps
                else:
                    at = at + ts
                    ap = ap + ps
                    atp = atp + ts * ps
                    att = att + ts * ts
                    app = app + ps * ps
            st[...] += at
            sp[...] += ap
            stp[...] += atp
            stt[...] += att
            spp[...] += app

        if rem == tn:                   # every tile is full-width
            _accum(tn)
        else:
            if grid_n > 1:
                @pl.when(j != last)
                def _steady():
                    _accum(tn)

            @pl.when(j == last)
            def _tail():
                _accum(rem)

        @pl.when(j == last)
        def _finalize():
            s_t = jnp.sum(st[...], axis=-1, keepdims=True)
            s_p = jnp.sum(sp[...], axis=-1, keepdims=True)
            s_tp = jnp.sum(stp[...], axis=-1, keepdims=True)
            s_tt = jnp.sum(stt[...], axis=-1, keepdims=True)
            s_pp = jnp.sum(spp[...], axis=-1, keepdims=True)
            cov = s_tp - s_t * s_p * inv_n
            var_t = s_tt - s_t * s_t * inv_n
            var_p = s_pp - s_p * s_p * inv_n
            o_ref[...] = cov * jax.lax.rsqrt(var_t * var_p + 1e-8)

    return kernel


def pearson_correlation(t, p, *, tm=None, tn=None,
                        vmem_budget=24 * 1024 * 1024):
    """t, p: (M, N) arrays -> (M, 1) per-row Pearson correlations."""
    m, n = t.shape
    assert p.shape == (m, n)
    # Row tile: full m when small (legal even if m % 8 != 0), else 256-row
    # blocks on a "parallel" leading axis (megacore / VMEM bound).
    if tm is None:
        tm = m if m <= 256 else 256
    # Column tile from a VMEM budget: 2 inputs x 2 pipeline buffers per block.
    itemsize = max(t.dtype.itemsize, p.dtype.itemsize)
    if tn is None:
        per_col_bytes = 4 * tm * itemsize
        tn = max(128, (vmem_budget // per_col_bytes) // 128 * 128)
        tn = min(tn, 4096)
    tn = min(tn, _round_up(n, 128))

    grid_m = pl.cdiv(m, tm)
    grid_n = pl.cdiv(n, tn)

    out = pl.pallas_call(
        _make_pearson_kernel(n, tn, grid_n),
        out_shape=jax.ShapeDtypeStruct((m, 1), jnp.float32),
        grid=(grid_m, grid_n),
        in_specs=[pl.BlockSpec((tm, tn), lambda i, j: (i, j)),
                  pl.BlockSpec((tm, tn), lambda i, j: (i, j))],
        out_specs=pl.BlockSpec((tm, 1), lambda i, j: (i, 0)),
        scratch_shapes=[pltpu.VMEM((tm, 128), jnp.float32)] * 7,
        compiler_params=pltpu.CompilerParams(
            dimension_semantics=("parallel", "arbitrary"),
            vmem_limit_bytes=48 * 1024 * 1024),
    )(t, p)
    return out


# ----------------------------------------------------------------------------
# CCACriterion (JAX/Pallas port of the PyTorch module)
# ----------------------------------------------------------------------------
class CCACriterion:
    def __init__(self, num_layers: int, art_dim: int, seed: int = 0):
        self.num_layers = num_layers
        self.art_dim = art_dim
        self.seed = seed
        self._store_emas = False
        self._true_emas = []
        self._pred_emas = [[] for _ in range(num_layers)]

    def disable_ema_store(self):
        self._store_emas = False
        self._true_emas = []
        self._pred_emas = [[] for _ in range(self.num_layers)]

    def enable_ema_store(self):
        self._store_emas = True

    def forward(self, xs, ema, ema_lens):
        # PyTorch semantics:
        #   per layer: xs[i][:, :ema.size(1)].contiguous().view(-1, d2)
        #   ema.view(-1, d1)  (free contiguous reshape -> no kernel)
        # Returns None; ema_lens unused in forward (as in PyTorch).
        if self._store_emas:
            s1 = ema.shape[1]
            for i in range(self.num_layers):
                self._pred_emas[i].append(truncate_flatten(xs[i], s1))
            self._true_emas.append(ema.reshape(-1, ema.shape[-1]))
        return None

    # TODO(synk): CCA.fit_transform (iterative / eigendecomposition CCA from
    # cca_zoo) has no clean Pallas equivalent; only the Pearson reduction it
    # feeds is provided (pearson_correlation above).
    def compute_correlations(self):
        raise NotImplementedError("CCA fit_transform not translated to Pallas")


if __name__ == "__main__":
    num_layers = 3
    art_dim = 4
    b, s1, s2, d1, d2 = 2, 8, 16, 32, 32

    key = jax.random.PRNGKey(0)
    keys = jax.random.split(key, num_layers + 4)
    xs = [jax.random.normal(keys[i], (b, s2, d2), dtype=jnp.float32)
          for i in range(num_layers)]
    ema = jax.random.normal(keys[num_layers], (b, s1, d1), dtype=jnp.float32)
    ema_lens = jnp.full((b,), s1, dtype=jnp.float32)

    crit = CCACriterion(num_layers=num_layers, art_dim=art_dim, seed=0)
    crit.enable_ema_store()
    out = crit.forward(xs, ema, ema_lens)
    assert out is None  # forward returns None, like the PyTorch module

    # Verify stored buffers against the PyTorch slicing/reshape semantics.
    for i in range(num_layers):
        got = jax.block_until_ready(crit._pred_emas[i][0])
        ref = xs[i][:, :s1].reshape(-1, d2)
        assert got.shape == (b * s1, d2)
        assert jnp.allclose(got, ref), f"pred ema mismatch at layer {i}"
    got_true = jax.block_until_ready(crit._true_emas[0])
    assert got_true.shape == (b * s1, d1)
    assert jnp.allclose(got_true, ema.reshape(-1, d1)), "true ema mismatch"

    # Non-multiple-of-128 width / odd truncation length (partial column tile).
    d3, s1_odd = 24, 7
    x_odd = jax.random.normal(keys[num_layers + 1], (b, s2, d3),
                              dtype=jnp.float32)
    got_odd = jax.block_until_ready(truncate_flatten(x_odd, s1_odd))
    ref_odd = x_odd[:, :s1_odd].reshape(-1, d3)
    assert got_odd.shape == (b * s1_odd, d3)
    assert jnp.allclose(got_odd, ref_odd), "odd-shape truncate mismatch"

    # Pearson reference (two-pass centered).
    def _ref_pearson(a, c):
        a = a - a.mean(axis=-1, keepdims=True)
        c = c - c.mean(axis=-1, keepdims=True)
        num = (a * c).sum(-1, keepdims=True)
        den = jnp.sqrt((a * a).sum(-1, keepdims=True)
                       * (c * c).sum(-1, keepdims=True) + 1e-8)
        return num / den

    # 1) Tiny case from the module's forward shapes (single tile, tail mask).
    t1 = jax.random.normal(keys[num_layers + 2], (art_dim, b * s1), jnp.float32)
    p1 = 0.5 * t1 + 0.5 * jax.random.normal(jax.random.PRNGKey(1),
                                            (art_dim, b * s1), jnp.float32)
    corr1 = jax.block_until_ready(pearson_correlation(t1, p1))
    assert corr1.shape == (art_dim, 1)
    assert jnp.allclose(corr1, _ref_pearson(t1, p1), atol=1e-4), "pearson #1"

    # 2) Multi-tile N, large mean offset (shifted-moments numerics), rows % 8 != 0.
    m2, n2 = 5, 1000
    base = jax.random.normal(keys[num_layers + 3], (m2, n2), jnp.float32)
    t2 = base + 10.0
    p2 = 0.5 * base + 0.5 * jax.random.normal(jax.random.PRNGKey(2), (m2, n2),
                                              jnp.float32) - 3.0
    corr2 = jax.block_until_ready(pearson_correlation(t2, p2, tn=256))
    assert corr2.shape == (m2, 1)
    assert jnp.allclose(corr2, _ref_pearson(t2, p2), atol=1e-3), "pearson #2"

    # 3) Multi-block M ("parallel" axis) + multi-tile N with tails.
    m3, n3 = 20, 300
    t3 = jax.random.normal(jax.random.PRNGKey(3), (m3, n3), jnp.float32)
    p3 = 0.3 * t3 + jax.random.normal(jax.random.PRNGKey(4), (m3, n3),
                                      jnp.float32)
    corr3 = jax.block_until_ready(pearson_correlation(t3, p3, tm=8, tn=128))
    assert corr3.shape == (m3, 1)
    assert jnp.allclose(corr3, _ref_pearson(t3, p3), atol=1e-4), "pearson #3"

    print("KERNEL_OK")
</pallas_src>

<mosaic_0001>
module attributes {stable_mosaic.version = 11 : i64} {
  func.func @_copy_block_kernel(%arg0: i32, %arg1: i32, %arg2: memref<2x128xf32, #tpu.memory_space<vmem>>, %arg3: memref<2x128xf32, #tpu.memory_space<vmem>>) attributes {dimension_semantics = [#tpu.dimension_semantics<parallel>, #tpu.dimension_semantics<parallel>], iteration_bounds = array<i64: 1, 2>, scalar_prefetch = 0 : i64, scratch_operands = 0 : i64, tpu.core_type = #tpu.core_type<tc>, window_params = [{transform_indices = @transform_0, window_bounds = array<i64: 2, 128>}, {transform_indices = @transform_1, window_bounds = array<i64: 2, 128>}]} {
    %c0 = arith.constant 0 : index
    %c0_0 = arith.constant 0 : index
    %0 = vector.load %arg2[%c0, %c0_0] : memref<2x128xf32, #tpu.memory_space<vmem>>, vector<2x128xf32>
    %c0_1 = arith.constant 0 : index
    %c0_2 = arith.constant 0 : index
    %1 = vector.load %arg3[%c0_1, %c0_2] : memref<2x128xf32, #tpu.memory_space<vmem>>, vector<2x128xf32>
    tpu.vector_store %arg3[%c0_1, %c0_2], %0 {strides = array<i32>} : memref<2x128xf32, #tpu.memory_space<vmem>>, vector<2x128xf32>,
    return
  }
  func.func @transform_0(%arg0: i32, %arg1: i32) -> (i32, i32) {
    %c0_i32 = arith.constant 0 : i32
    return %arg0, %arg1 : i32, i32
  }
  func.func @transform_1(%arg0: i32, %arg1: i32) -> (i32, i32) {
    %c0_i32 = arith.constant 0 : i32
    return %arg0, %arg1 : i32, i32
  }
}

</mosaic_0001>

<llo_original>
// kernel: tpu_custom_call.1
$region0: #{tpu_custom_call.1}
  #allocation0 [shape = 'u32[]', space=smem, size = 0x4, offset = 0x4, fixed_abs, tag = 'smem constant byte address 0x4 - core index']
  #allocation1 [shape = 'u32[144,128]{1,0:T(1,128)}', space=vmem, size = 0x12000, scoped, tag = 'internal scratch']
  %s0 = inlined_call_operand.hbm [shape: f32[2,512], index: 0, kind: input, shape index: {}]
  %s1 = inlined_call_operand.hbm [shape: f32[2,256], index: 1, kind: output, shape index: {}]
  %s2 = sld [smem:[#allocation0]]
  $region41: #{tpu_custom_call.1} parent=0
    _
  %s4 = ssub.s32 1, %s2
  %s5 = scalar_select 0, %s4, %s2
  $region1: #{tpu_custom_call.1} parent=0
    #allocation2 [shape = 'u8[2048]{0}', space=vmem, size = 0x800, scoped, tag = 'input window, operand 0']
    #allocation3 [shape = 's32[2]{0}', space=sflag, size = 0x8, scoped, tag = 'scoped memory for tpu_custom_call.1']
    #allocation4 [shape = 's32[2]{0}', space=sflag, size = 0x8, scoped, tag = 'scoped memory for tpu_custom_call.1']
    #allocation5 [shape = 'u8[2048]{0}', space=vmem, size = 0x800, scoped, tag = 'output window, operand 0']
    %6 = vsyncpa [#allocation3], 0
    %s7 = scalar_lea.sflag [#allocation3], 1
    %8 = vsyncpa %s7, 0
    %9 = vsyncpa [#allocation4], 0
    %s10 = scalar_lea.sflag [#allocation4], 1
    %11 = vsyncpa %s10, 0
    loop: start=0, step=1, limit=4
    $region2: #{tpu_custom_call.1} parent=1 // loop_pre_header
      _
    $region3: #{tpu_custom_call.1} parent=1 // loop_header
      %s13 = sphi 0, %s17
      %p14 = scmp.ge.s32.totalorder %s13, 4
      %s20 = sphi 0, %s32
      %s21 = sphi 0, %s28
      %s22 = sphi 0, %s20
      %s23 = sphi 0, %s21
      %s24 = sphi 0, %s22
      %s25 = sphi 0, %s23
      %s37 = sphi 0, %s39
      %s40 = sphi 0, %s37
      %s41 = sphi 0, %s40
      %s57 = sphi 0, %s41
      %s65 = sphi 0, %s67
      %s68 = sphi 0, %s65
      %s69 = sphi 0, %s68
      %s85 = sphi 0, %s69
    $region4: #{tpu_custom_call.1} parent=1 // loop_header_branch
      %16 = sbr.rel (%p14) target = $region8
    $region5: #{tpu_custom_call.1} parent=1 // loop_body
      %s18 = ssub.s32 %s13, 1
      %s19 = ssub.s32 %s13, 2
      %s26 = sadd.s32 1, %s21
      %p27 = scmp.ge.s32.totalorder %s26, 2
      %s28 = scalar_select %p27, 0, %s26
      %s29 = sadd.s32 1, %s20
      %s30 = scalar_select %p27, %s29, %s20
      %p31 = scmp.ge.s32.totalorder %s30, 1
      %s32 = scalar_select %p31, 0, %s30
      %s33 = ssub.s32 %s20, %s32
      %s34 = ssub.s32 %s21, %s28
      %s35 = sor.u32 %s33, %s34
      %p36 = scmp.eq.s32.totalorder %s35, 0
      %s38 = sadd.s32 %s37, 1
      %s39 = scalar_select %p36, %s37, %s38
      %p42 = pneg %p36
      %p43 = scmp.eq.s32.totalorder %s13, 1
      %p44 = por %p42, %p43
      %p45 = scmp.ne.s32.totalorder %s37, %s40
      %p46 = scmp.eq.s32.totalorder %s13, 0
      %p47 = por %p45, %p46
      %p48 = scmp.ne.s32.totalorder %s37, %s40
      %p49 = scmp.eq.s32.totalorder %s18, 1
      %p50 = por %p48, %p49
      %p51 = scmp.ne.s32.totalorder %s40, %s41
      %p52 = scmp.eq.s32.totalorder %s18, 0
      %p53 = por %p51, %p52
      %p54 = scmp.ne.s32.totalorder %s40, %s41
      %p55 = scmp.eq.s32.totalorder %s19, 1
      %p56 = por %p54, %p55
      %p58 = scmp.ne.s32.totalorder %s41, %s57
      %p59 = scmp.eq.s32.totalorder %s19, 0
      %p60 = por %p58, %p59
      %s61 = ssub.s32 %s20, %s32
      %s62 = ssub.s32 %s21, %s28
      %s63 = sor.u32 %s61, %s62
      %p64 = scmp.eq.s32.totalorder %s63, 0
      %s66 = sadd.s32 %s65, 1
      %s67 = scalar_select %p64, %s65, %s66
      %p70 = pneg %p64
      %p71 = scmp.eq.s32.totalorder %s13, 1
      %p72 = por %p70, %p71
      %p73 = scmp.ne.s32.totalorder %s65, %s68
      %p74 = scmp.eq.s32.totalorder %s13, 0
      %p75 = por %p73, %p74
      %p76 = scmp.ne.s32.totalorder %s65, %s68
      %p77 = scmp.eq.s32.totalorder %s18, 1
      %p78 = por %p76, %p77
      %p79 = scmp.ne.s32.totalorder %s68, %s69
      %p80 = scmp.eq.s32.totalorder %s18, 0
      %p81 = por %p79, %p80
      %p82 = scmp.ne.s32.totalorder %s68, %s69
      %p83 = scmp.eq.s32.totalorder %s19, 1
      %p84 = por %p82, %p83
      %p86 = scmp.ne.s32.totalorder %s69, %s85
      %p87 = scmp.eq.s32.totalorder %s19, 0
      %p88 = por %p86, %p87
      %p89 = scmp.le.s32.totalorder 1, %s13
      %p90 = scmp.lt.s32.totalorder %s13, 3
      %p91 = pnand %p89, %p90
      %p92 = pneg %p91
      // Predicated region
      $region9: #{tpu_custom_call.1} parent=5 // pred_check
        _
      $region10: #{tpu_custom_call.1} parent=5 // pred_check_branch
        %94 = sbr.rel (%p91) target = $region12
      $region11: #{tpu_custom_call.1} parent=5 // pred_region
        %s95 = ssub.s32 %s13, 1
      $region12: #{tpu_custom_call.1} parent=5 // pred_fallthru
        _
      %p96 = scmp.lt.s32.totalorder %s13, 2
      // Predicated region
      $region13: #{tpu_custom_call.1} parent=5 // pred_check
        %p97 = pneg %p96
      $region14: #{tpu_custom_call.1} parent=5 // pred_check_branch
        %99 = sbr.rel (%p97) target = $region16
      $region15: #{tpu_custom_call.1} parent=5 // pred_region
        // Predicated region
        $region17: #{tpu_custom_call.1} parent=15 // pred_check
          %p100 = pneg %p47
        $region18: #{tpu_custom_call.1} parent=15 // pred_check_branch
          %102 = sbr.rel (%p100) target = $region20
        $region19: #{tpu_custom_call.1} parent=15 // pred_region
          %s103 = sand.u32 %s37, 1
          %s104 = scalar_lea.sflag [#allocation3], %s103
          %s105 = sand.u32 %s37, 1
          %s106 = smul.addr %s105, 2
          %s107 = scalar_lea.vmem [#allocation2], %s106
          %s109 = ssub.s32 32, 32
          %110 = vsyncadd %s104, %s109
          %s111 = smul.addr %s20, 4
          %s112 = sadd.s32 %s21, %s111
          %s113 = smul.addr %s112, 32
          %s114 = scalar_lea.hbm %s0, %s113
          %s116 = sshll.u32 %s107, 4
          %s117 = int_to_ptr.vmem [resolvable:$true] %s116
          %119 = dma.hbm_to_vmem [thread:$0]  %s114, 32, %s117, %s104
        $region20: #{tpu_custom_call.1} parent=15 // pred_fallthru
          _
      $region16: #{tpu_custom_call.1} parent=5 // pred_fallthru
        _
      %p120 = scmp.le.s32.totalorder 1, %s13
      %p121 = scmp.lt.s32.totalorder %s13, 3
      %p122 = pnand %p120, %p121
      %p123 = pneg %p122
      // Predicated region
      $region21: #{tpu_custom_call.1} parent=5 // pred_check
        _
      $region22: #{tpu_custom_call.1} parent=5 // pred_check_branch
        %125 = sbr.rel (%p122) target = $region24
      $region23: #{tpu_custom_call.1} parent=5 // pred_region
        %s126 = ssub.s32 %s13, 1
        %s127 = sand.u32 %s40, 1
        %s128 = scalar_lea.sflag [#allocation3], %s127
        %s129 = sand.u32 %s40, 1
        %s130 = smul.addr %s129, 2
        %s131 = scalar_lea.vmem [#allocation2], %s130
        // Predicated region
        $region25: #{tpu_custom_call.1} parent=23 // pred_check
          %p132 = pneg %p53
        $region26: #{tpu_custom_call.1} parent=23 // pred_check_branch
          %134 = sbr.rel (%p132) target = $region28
        $region27: #{tpu_custom_call.1} parent=23 // pred_region
          %135 = dma.done %s128, 32
        $region28: #{tpu_custom_call.1} parent=23 // pred_fallthru
          _
        %s136 = sand.u32 %s40, 1
        %s137 = scalar_lea.sflag [#allocation3], %s136
        %s138 = sand.u32 %s40, 1
        %s139 = smul.addr %s138, 2
        %s140 = scalar_lea.vmem [#allocation2], %s139
        %p141 = pneg %p53
        %p142 = pneg %p50
        %p143 = pneg %p81
        %p144 = pneg %p78
        %s145 = sand.u32 %s68, 1
        %s146 = scalar_lea.sflag [#allocation4], %s145
        %s147 = sand.u32 %s68, 1
        %s148 = smul.addr %s147, 2
        %s149 = scalar_lea.vmem [#allocation5], %s148
        %v150 = vld [vmem:[%s131] sm:$0x3]
        %151 = vst [vmem:[%s149] sm:$0x3] %v150
        %s152 = sand.u32 %s68, 1
        %s153 = scalar_lea.sflag [#allocation4], %s152
        %s154 = sand.u32 %s68, 1
        %s155 = smul.addr %s154, 2
        %s156 = scalar_lea.vmem [#allocation5], %s155
        // Predicated region
        $region29: #{tpu_custom_call.1} parent=23 // pred_check
          %p157 = pneg %p78
        $region30: #{tpu_custom_call.1} parent=23 // pred_check_branch
          %159 = sbr.rel (%p157) target = $region32
        $region31: #{tpu_custom_call.1} parent=23 // pred_region
          %s161 = ssub.s32 32, 32
          %162 = vsyncadd %s153, %s161
          %s163 = smul.addr %s22, 2
          %s164 = sadd.s32 %s23, %s163
          %s165 = smul.addr %s164, 32
          %s166 = scalar_lea.hbm %s1, %s165
          %s168 = sshll.u32 %s156, 4
          %s169 = int_to_ptr.vmem [resolvable:$true] %s168
          %171 = dma.vmem_to_hbm [thread:$0]  %s169, 32, %s166, %s153
        $region32: #{tpu_custom_call.1} parent=23 // pred_fallthru
          _
      $region24: #{tpu_custom_call.1} parent=5 // pred_fallthru
        _
      %p172 = scmp.le.s32.totalorder 2, %s13
      // Predicated region
      $region33: #{tpu_custom_call.1} parent=5 // pred_check
        %p173 = pneg %p172
      $region34: #{tpu_custom_call.1} parent=5 // pred_check_branch
        %175 = sbr.rel (%p173) target = $region36
      $region35: #{tpu_custom_call.1} parent=5 // pred_region
        %s176 = ssub.s32 %s13, 2
        // Predicated region
        $region37: #{tpu_custom_call.1} parent=35 // pred_check
          %p177 = pneg %p84
        $region38: #{tpu_custom_call.1} parent=35 // pred_check_branch
          %179 = sbr.rel (%p177) target = $region40
        $region39: #{tpu_custom_call.1} parent=35 // pred_region
          %s180 = sand.u32 %s69, 1
          %s181 = scalar_lea.sflag [#allocation4], %s180
          %s182 = sand.u32 %s69, 1
          %s183 = smul.addr %s182, 2
          %s184 = scalar_lea.vmem [#allocation5], %s183
          %185 = dma.done %s181, 32
        $region40: #{tpu_custom_call.1} parent=35 // pred_fallthru
          _
      $region36: #{tpu_custom_call.1} parent=5 // pred_fallthru
        _
    $region6: #{tpu_custom_call.1} parent=1 // loop_footer
      %s17 = sadd.s32 1, %s13
    $region7: #{tpu_custom_call.1} parent=1 // loop_footer_branch
      %12 = sbr.rel target = $region3
    $region8: #{tpu_custom_call.1} parent=1 // loop_exit
      _
    %186 = vsyncpa [#allocation3], 1
    %s187 = scalar_lea.sflag [#allocation3], 1
    %188 = vsyncpa %s187, 1
    %189 = vsyncpa [#allocation4], 1
    %s190 = scalar_lea.sflag [#allocation4], 1
    %191 = vsyncpa %s190, 1

</llo_original>
